<compile_context>
chip_gen: v7x
topology: tpu7x:2x2x1
jax: 0.10.0
libtpu: 0.0.40
codegen_flags: <defaults>
</compile_context>

<pallas_src>
import functools

import jax
import jax.numpy as jnp
from jax.experimental import pallas as pl
from jax.experimental.pallas import tpu as pltpu


def _mp_kernel(adj_ref, xk_ref, xi_ref, w1_ref, w2_ref, b1_ref, b2_ref,
               o_ref, acc_ref, deg_ref, *, neighbor_aggr):
    """Grid point (i, k): row-tile i of the output, k-th chunk of the contraction."""
    k = pl.program_id(1)
    nk = pl.num_programs(1)

    @pl.when(k == 0)
    def _init():
        acc_ref[...] = jnp.zeros_like(acc_ref)
        if neighbor_aggr == 'mean':
            deg_ref[...] = jnp.zeros_like(deg_ref)

    # Stream one adj tile (possibly bf16 in HBM), up-cast in VMEM so the
    # accumulation over k stays in f32.
    adj = adj_ref[...].astype(jnp.float32)                       # [TM, TK]
    xk = xk_ref[...].astype(jnp.float32)                         # [TK, D_in]

    # x1 partial: adj_tile @ x_chunk  (accumulated over k)
    acc_ref[...] += jnp.dot(adj, xk, preferred_element_type=jnp.float32)

    if neighbor_aggr == 'mean':
        # Partial degree = row-sum of the adj tile (XLU lane reduction).
        deg_ref[...] += jnp.sum(adj, axis=1, keepdims=True)      # [TM, 1]

    @pl.when(k == nk - 1)
    def _finalize():
        x_i = xi_ref[...].astype(jnp.float32)                    # [TM, D_in]
        x1 = acc_ref[...]                                        # [TM, D_in]

        # fc2(x) and fc1(adj @ x): tiny K = D_in contractions, once per row tile.
        x_node = jnp.dot(x_i, w2_ref[...], preferred_element_type=jnp.float32)
        m = jnp.dot(x1, w1_ref[...], preferred_element_type=jnp.float32)

        if neighbor_aggr == 'sum':
            out = x_node + m + (b1_ref[...] + b2_ref[...])
        elif neighbor_aggr == 'mean':
            deg = deg_ref[...]                                   # [TM, 1]
            # Zero-degree guard (isolated nodes): PyTorch would produce inf/NaN,
            # here the message term is simply dropped for deg == 0.
            inv = jnp.where(deg != 0.0, 1.0 / deg, 0.0)
            out = x_node + b2_ref[...] + (m + b1_ref[...]) * inv
        else:
            raise ValueError(f"unknown neighbor_aggr: {neighbor_aggr}")

        o_ref[...] = out.astype(o_ref.dtype)


def _pick_tile(n, target, align):
    """Largest usable tile: `target` if it divides n and is `align`-aligned, else n."""
    if n % target == 0 and target % align == 0 and target <= n:
        return target
    return n  # full extent always satisfies the (8, 128) block constraint


def message_passing(x, adj, w1, b1, w2, b2, neighbor_aggr='sum', *,
                    block_m=512, block_k=512, stream_adj_bf16=False):
    """Pallas TPU forward pass of MessagePassing.

    x:   [N, D_in]  float32 node features
    adj: [N, N]     dense adjacency (torch.mm / torch.spmm reproduced densely)
    w1, w2: [D_in, D_out]  (PyTorch Linear weights, pre-transposed)
    b1, b2: [D_out]
    stream_adj_bf16: stream adj tiles as bf16 (exact for 0/1 adjacencies) to halve
                     the dominant HBM traffic; accumulation remains f32.
    """
    N, d_in = x.shape
    d_out = w1.shape[1]
    assert adj.shape == (N, N)

    if stream_adj_bf16:
        adj = adj.astype(jnp.bfloat16)

    tm = _pick_tile(N, block_m, 8)     # row tile: multiple of 8 sublanes (or full N)
    tk = _pick_tile(N, block_k, 128)   # k   tile: multiple of 128 lanes   (or full N)
    grid = (N // tm, N // tk)

    w1 = w1.astype(jnp.float32)
    w2 = w2.astype(jnp.float32)
    b1_2d = b1.reshape(1, d_out).astype(jnp.float32)
    b2_2d = b2.reshape(1, d_out).astype(jnp.float32)
    x = x.astype(jnp.float32)

    kernel = functools.partial(_mp_kernel, neighbor_aggr=neighbor_aggr)

    return pl.pallas_call(
        kernel,
        out_shape=jax.ShapeDtypeStruct((N, d_out), jnp.float32),
        grid_spec=pltpu.PrefetchScalarGridSpec(
            num_scalar_prefetch=0,
            grid=grid,
            in_specs=[
                pl.BlockSpec((tm, tk), lambda i, k: (i, k)),        # adj tile
                pl.BlockSpec((tk, d_in), lambda i, k: (k, 0)),      # x, contraction view
                pl.BlockSpec((tm, d_in), lambda i, k: (i, 0)),      # x, node/row view
                pl.BlockSpec((d_in, d_out), lambda i, k: (0, 0)),   # W1 (resident)
                pl.BlockSpec((d_in, d_out), lambda i, k: (0, 0)),   # W2 (resident)
                pl.BlockSpec((1, d_out), lambda i, k: (0, 0)),      # b1 (resident)
                pl.BlockSpec((1, d_out), lambda i, k: (0, 0)),      # b2 (resident)
            ],
            out_specs=pl.BlockSpec((tm, d_out), lambda i, k: (i, 0)),
            scratch_shapes=[
                pltpu.VMEM((tm, d_in), jnp.float32),   # x1 accumulator
                pltpu.VMEM((tm, 1), jnp.float32),      # degree accumulator
            ],
        ),
        compiler_params=pltpu.CompilerParams(
            # Row axis shards across TensorCores (megacore / v7x); reduction axis
            # is last and must be 'arbitrary' (output block revisited across k).
            dimension_semantics=("parallel", "arbitrary")),
    )(adj, x, x, w1, w2, b1_2d, b2_2d)


def message_passing_ref(x, adj, w1, b1, w2, b2, neighbor_aggr='sum'):
    """Pure-JAX reference (mirrors the PyTorch module exactly)."""
    x1 = adj @ x
    m = x1 @ w1 + b1
    x_node = x @ w2 + b2
    if neighbor_aggr == 'sum':
        return x_node + m
    deg = adj @ jnp.ones((x.shape[0], 1), dtype=x.dtype)
    return x_node + m / deg


def _make_inputs(key, n, d_in, d_out):
    k_x, k_adj, k_w1, k_b1, k_w2, k_b2 = jax.random.split(key, 6)
    x = jax.random.normal(k_x, (n, d_in), dtype=jnp.float32)
    # Random symmetric-ish 0/1 adjacency with self-loops (no zero-degree nodes,
    # and exactly representable in bf16 so bf16 streaming is lossless).
    a = (jax.random.uniform(k_adj, (n, n)) < 0.3).astype(jnp.float32)
    adj = jnp.clip(a + a.T + jnp.eye(n, dtype=jnp.float32), 0.0, 1.0)
    bound = 1.0 / jnp.sqrt(jnp.float32(d_in))
    w1 = jax.random.uniform(k_w1, (d_in, d_out), jnp.float32, -bound, bound)
    b1 = jax.random.uniform(k_b1, (d_out,), jnp.float32, -bound, bound)
    w2 = jax.random.uniform(k_w2, (d_in, d_out), jnp.float32, -bound, bound)
    b2 = jax.random.uniform(k_b2, (d_out,), jnp.float32, -bound, bound)
    return x, adj, w1, b1, w2, b2


if __name__ == "__main__":
    key = jax.random.PRNGKey(0)
    input_dim, output_dim = 8, 32

    # (N, block_m, block_k): a toy single-block case matching the module's sizes,
    # and a larger case that exercises the tiled / pipelined 4x4 grid path.
    cases = [(16, 512, 512), (512, 128, 128)]

    ok = True
    for idx, (N, bm, bk) in enumerate(cases):
        case_key = jax.random.fold_in(key, idx)
        x, adj, w1, b1, w2, b2 = _make_inputs(case_key, N, input_dim, output_dim)
        for aggr in ('sum', 'mean'):
            out = message_passing(x, adj, w1, b1, w2, b2, neighbor_aggr=aggr,
                                  block_m=bm, block_k=bk, stream_adj_bf16=True)
            out = jax.block_until_ready(out)
            ref = message_passing_ref(x, adj, w1, b1, w2, b2, neighbor_aggr=aggr)
            # Tolerance accounts for MXU default (bf16-pass) matmul precision and for
            # the blocked f32 accumulation order differing from XLA's single dot.
            if not jnp.allclose(out, ref, atol=2e-2, rtol=2e-2):
                ok = False

    if ok:
        print("KERNEL_OK")
</pallas_src>

<mosaic_0001>
module attributes {stable_mosaic.version = 11 : i64} {
  func.func @_mp_kernel(%arg0: i32, %arg1: i32, %arg2: memref<16x16xbf16, #tpu.memory_space<vmem>>, %arg3: memref<16x8xf32, #tpu.memory_space<vmem>>, %arg4: memref<16x8xf32, #tpu.memory_space<vmem>>, %arg5: memref<8x32xf32, #tpu.memory_space<vmem>>, %arg6: memref<8x32xf32, #tpu.memory_space<vmem>>, %arg7: memref<1x32xf32, #tpu.memory_space<vmem>>, %arg8: memref<1x32xf32, #tpu.memory_space<vmem>>, %arg9: memref<16x32xf32, #tpu.memory_space<vmem>>, %arg10: memref<16x8xf32, #tpu.memory_space<vmem>>, %arg11: memref<16x1xf32, #tpu.memory_space<vmem>>) attributes {dimension_semantics = [#tpu.dimension_semantics<parallel>, #tpu.dimension_semantics<arbitrary>], iteration_bounds = array<i64: 1, 1>, scalar_prefetch = 0 : i64, scratch_operands = 2 : i64, tpu.core_type = #tpu.core_type<tc>, window_params = [{transform_indices = @transform_0, window_bounds = array<i64: 16, 16>}, {transform_indices = @transform_1, window_bounds = array<i64: 16, 8>}, {transform_indices = @transform_2, window_bounds = array<i64: 16, 8>}, {pipeline_mode = #tpu.pipeline_mode<synchronous>, transform_indices = @transform_3, window_bounds = array<i64: 8, 32>}, {pipeline_mode = #tpu.pipeline_mode<synchronous>, transform_indices = @transform_4, window_bounds = array<i64: 8, 32>}, {pipeline_mode = #tpu.pipeline_mode<synchronous>, transform_indices = @transform_5, window_bounds = array<i64: 1, 32>}, {pipeline_mode = #tpu.pipeline_mode<synchronous>, transform_indices = @transform_6, window_bounds = array<i64: 1, 32>}, {transform_indices = @transform_7, window_bounds = array<i64: 16, 32>}]} {
    %c0_i32 = arith.constant 0 : i32
    %0 = arith.cmpi eq, %arg1, %c0_i32 : i32
    %1 = arith.extui %0 : i1 to i32
    %c0_i32_0 = arith.constant 0 : i32
    %2 = arith.cmpi ne, %1, %c0_i32_0 : i32
    scf.if %2 {
      %cst_10 = arith.constant 0.000000e+00 : f32
      %13 = vector.broadcast %cst_10 : f32 to vector<16x8xf32>
      %c0_11 = arith.constant 0 : index
      %c0_12 = arith.constant 0 : index
      %14 = vector.load %arg10[%c0_11, %c0_12] : memref<16x8xf32, #tpu.memory_space<vmem>>, vector<16x8xf32>
      tpu.vector_store %arg10[%c0_11, %c0_12], %13 {strides = array<i32>} : memref<16x8xf32, #tpu.memory_space<vmem>>, vector<16x8xf32>,
    } else {
    }
    %c0 = arith.constant 0 : index
    %c0_1 = arith.constant 0 : index
    %3 = vector.load %arg2[%c0, %c0_1] : memref<16x16xbf16, #tpu.memory_space<vmem>>, vector<16x16xbf16>
    %4 = arith.extf %3 : vector<16x16xbf16> to vector<16x16xf32>
    %c0_2 = arith.constant 0 : index
    %c0_3 = arith.constant 0 : index
    %5 = vector.load %arg3[%c0_2, %c0_3] : memref<16x8xf32, #tpu.memory_space<vmem>>, vector<16x8xf32>
    %c0_4 = arith.constant 0 : index
    %c0_5 = arith.constant 0 : index
    %6 = vector.load %arg10[%c0_4, %c0_5] : memref<16x8xf32, #tpu.memory_space<vmem>>, vector<16x8xf32>
    %cst = arith.constant dense<0.000000e+00> : vector<16x8xf32>
    %7 = tpu.matmul %4, %5, %cst {dimension_numbers = #tpu.dot_dimension_numbers<[1], [0], [0], [1], [0, 0, 1, 1], [], []>} : vector<16x16xf32>, vector<16x8xf32>, vector<16x8xf32> -> vector<16x8xf32>
    %8 = arith.addf %6, %7 : vector<16x8xf32>
    %c0_6 = arith.constant 0 : index
    %c0_7 = arith.constant 0 : index
    %9 = vector.load %arg10[%c0_6, %c0_7] : memref<16x8xf32, #tpu.memory_space<vmem>>, vector<16x8xf32>
    tpu.vector_store %arg10[%c0_6, %c0_7], %8 {strides = array<i32>} : memref<16x8xf32, #tpu.memory_space<vmem>>, vector<16x8xf32>,
    %c0_i32_8 = arith.constant 0 : i32
    %10 = arith.cmpi eq, %arg1, %c0_i32_8 : i32
    %11 = arith.extui %10 : i1 to i32
    %c0_i32_9 = arith.constant 0 : i32
    %12 = arith.cmpi ne, %11, %c0_i32_9 : i32
    scf.if %12 {
      %c0_10 = arith.constant 0 : index
      %c0_11 = arith.constant 0 : index
      %13 = vector.load %arg4[%c0_10, %c0_11] : memref<16x8xf32, #tpu.memory_space<vmem>>, vector<16x8xf32>
      %c0_12 = arith.constant 0 : index
      %c0_13 = arith.constant 0 : index
      %14 = vector.load %arg10[%c0_12, %c0_13] : memref<16x8xf32, #tpu.memory_space<vmem>>, vector<16x8xf32>
      %c0_14 = arith.constant 0 : index
      %c0_15 = arith.constant 0 : index
      %15 = vector.load %arg6[%c0_14, %c0_15] : memref<8x32xf32, #tpu.memory_space<vmem>>, vector<8x32xf32>
      %cst_16 = arith.constant dense<0.000000e+00> : vector<16x32xf32>
      %16 = tpu.matmul %13, %15, %cst_16 {dimension_numbers = #tpu.dot_dimension_numbers<[1], [0], [0], [1], [0, 0, 1, 1], [], []>} : vector<16x8xf32>, vector<8x32xf32>, vector<16x32xf32> -> vector<16x32xf32>
      %c0_17 = arith.constant 0 : index
      %c0_18 = arith.constant 0 : index
      %17 = vector.load %arg5[%c0_17, %c0_18] : memref<8x32xf32, #tpu.memory_space<vmem>>, vector<8x32xf32>
      %cst_19 = arith.constant dense<0.000000e+00> : vector<16x32xf32>
      %18 = tpu.matmul %14, %17, %cst_19 {dimension_numbers = #tpu.dot_dimension_numbers<[1], [0], [0], [1], [0, 0, 1, 1], [], []>} : vector<16x8xf32>, vector<8x32xf32>, vector<16x32xf32> -> vector<16x32xf32>
      %19 = arith.addf %16, %18 : vector<16x32xf32>
      %c0_20 = arith.constant 0 : index
      %c0_21 = arith.constant 0 : index
      %20 = vector.load %arg7[%c0_20, %c0_21] : memref<1x32xf32, #tpu.memory_space<vmem>>, vector<1x32xf32>
      %c0_22 = arith.constant 0 : index
      %c0_23 = arith.constant 0 : index
      %21 = vector.load %arg8[%c0_22, %c0_23] : memref<1x32xf32, #tpu.memory_space<vmem>>, vector<1x32xf32>
      %22 = arith.addf %20, %21 : vector<1x32xf32>
      %23 = vector.broadcast %22 : vector<1x32xf32> to vector<16x32xf32>
      %24 = arith.addf %19, %23 : vector<16x32xf32>
      %c0_24 = arith.constant 0 : index
      %c0_25 = arith.constant 0 : index
      %25 = vector.load %arg9[%c0_24, %c0_25] : memref<16x32xf32, #tpu.memory_space<vmem>>, vector<16x32xf32>
      tpu.vector_store %arg9[%c0_24, %c0_25], %24 {strides = array<i32>} : memref<16x32xf32, #tpu.memory_space<vmem>>, vector<16x32xf32>,
    } else {
    }
    return
  }
  func.func @transform_0(%arg0: i32, %arg1: i32) -> (i32, i32) {
    %c0_i32 = arith.constant 0 : i32
    return %arg0, %arg1 : i32, i32
  }
  func.func @transform_1(%arg0: i32, %arg1: i32) -> (i32, i32) {
    %c0_i32 = arith.constant 0 : i32
    %c0_i32_0 = arith.constant 0 : i32
    return %arg1, %c0_i32 : i32, i32
  }
  func.func @transform_2(%arg0: i32, %arg1: i32) -> (i32, i32) {
    %c0_i32 = arith.constant 0 : i32
    %c0_i32_0 = arith.constant 0 : i32
    return %arg0, %c0_i32 : i32, i32
  }
  func.func @transform_3(%arg0: i32, %arg1: i32) -> (i32, i32) {
    %c0_i32 = arith.constant 0 : i32
    %c0_i32_0 = arith.constant 0 : i32
    %c0_i32_1 = arith.constant 0 : i32
    return %c0_i32, %c0_i32_0 : i32, i32
  }
  func.func @transform_4(%arg0: i32, %arg1: i32) -> (i32, i32) {
    %c0_i32 = arith.constant 0 : i32
    %c0_i32_0 = arith.constant 0 : i32
    %c0_i32_1 = arith.constant 0 : i32
    return %c0_i32, %c0_i32_0 : i32, i32
  }
  func.func @transform_5(%arg0: i32, %arg1: i32) -> (i32, i32) {
    %c0_i32 = arith.constant 0 : i32
    %c0_i32_0 = arith.constant 0 : i32
    %c0_i32_1 = arith.constant 0 : i32
    return %c0_i32, %c0_i32_0 : i32, i32
  }
  func.func @transform_6(%arg0: i32, %arg1: i32) -> (i32, i32) {
    %c0_i32 = arith.constant 0 : i32
    %c0_i32_0 = arith.constant 0 : i32
    %c0_i32_1 = arith.constant 0 : i32
    return %c0_i32, %c0_i32_0 : i32, i32
  }
  func.func @transform_7(%arg0: i32, %arg1: i32) -> (i32, i32) {
    %c0_i32 = arith.constant 0 : i32
    %c0_i32_0 = arith.constant 0 : i32
    return %arg0, %c0_i32 : i32, i32
  }
}

</mosaic_0001>

<llo_original>
// kernel: tpu_custom_call.1
$region0: #{tpu_custom_call.1}
  #allocation0 [shape = 'u32[]', space=smem, size = 0x4, offset = 0x4, fixed_abs, tag = 'smem constant byte address 0x4 - core index']
  #allocation1 [shape = 'u32[144,128]{1,0:T(1,128)}', space=vmem, size = 0x12000, scoped, tag = 'internal scratch']
  #allocation2 [shape = 'f32[16,8]{1,0:T(8,128)}', space=vmem, size = 0x2000, scoped, tag = 'scratch operand']
  #allocation3 [shape = 'f32[16,1]{1,0:T(8,128)}', space=vmem, size = 0x2000, scoped, tag = 'scratch operand']
  %s0 = inlined_call_operand.vmem [shape: bf16[16,16], index: 0, kind: input, shape index: {}]
  %s1 = inlined_call_operand.vmem [shape: f32[16,8], index: 1, kind: input, shape index: {}]
  %s2 = inlined_call_operand.vmem [shape: f32[16,8], index: 2, kind: input, shape index: {}]
  %s3 = inlined_call_operand.vmem [shape: f32[8,32], index: 3, kind: input, shape index: {}]
  %s4 = inlined_call_operand.vmem [shape: f32[8,32], index: 4, kind: input, shape index: {}]
  %s5 = inlined_call_operand.vmem [shape: f32[1,32], index: 5, kind: input, shape index: {}]
  %s6 = inlined_call_operand.vmem [shape: f32[1,32], index: 6, kind: input, shape index: {}]
  %s7 = inlined_call_operand.hbm [shape: f32[16,32], index: 7, kind: output, shape index: {}]
  %s8 = sld [smem:[#allocation0]]
  $region46: #{tpu_custom_call.1} parent=0
    _
  %s10 = ssub.s32 1, %s8
  %s11 = scalar_select 0, %s10, %s8
  $region1: #{tpu_custom_call.1} parent=0
    #allocation4 [shape = 'u8[8192]{0}', space=vmem, size = 0x2000, scoped, tag = 'output window, operand 0, single buffered']
    #allocation5 [shape = 's32[1]{0}', space=sflag, size = 0x4, scoped, tag = 'scoped memory for tpu_custom_call.1']
    %12 = vsyncpa [#allocation5], 0
    // Predicated region
    $region2: #{tpu_custom_call.1} parent=1 // pred_check
      _
    $region3: #{tpu_custom_call.1} parent=1 // pred_check_branch
      %14 = sbr.rel (0) target = $region5
    $region4: #{tpu_custom_call.1} parent=1 // pred_region
      _
    $region5: #{tpu_custom_call.1} parent=1 // pred_fallthru
      _
    // Predicated region
    $region6: #{tpu_custom_call.1} parent=1 // pred_check
      _
    $region7: #{tpu_custom_call.1} parent=1 // pred_check_branch
      %16 = sbr.rel (0) target = $region9
    $region8: #{tpu_custom_call.1} parent=1 // pred_region
      _
    $region9: #{tpu_custom_call.1} parent=1 // pred_fallthru
      _
    // Predicated region
    $region10: #{tpu_custom_call.1} parent=1 // pred_check
      _
    $region11: #{tpu_custom_call.1} parent=1 // pred_check_branch
      %18 = sbr.rel (0) target = $region13
    $region12: #{tpu_custom_call.1} parent=1 // pred_region
      _
    $region13: #{tpu_custom_call.1} parent=1 // pred_fallthru
      _
    // Predicated region
    $region14: #{tpu_custom_call.1} parent=1 // pred_check
      _
    $region15: #{tpu_custom_call.1} parent=1 // pred_check_branch
      %20 = sbr.rel (0) target = $region17
    $region16: #{tpu_custom_call.1} parent=1 // pred_region
      _
    $region17: #{tpu_custom_call.1} parent=1 // pred_fallthru
      _
    // Predicated region
    $region18: #{tpu_custom_call.1} parent=1 // pred_check
      _
    $region19: #{tpu_custom_call.1} parent=1 // pred_check_branch
      %22 = sbr.rel (0) target = $region21
    $region20: #{tpu_custom_call.1} parent=1 // pred_region
      _
    $region21: #{tpu_custom_call.1} parent=1 // pred_fallthru
      _
    // Predicated region
    $region22: #{tpu_custom_call.1} parent=1 // pred_check
      _
    $region23: #{tpu_custom_call.1} parent=1 // pred_check_branch
      %24 = sbr.rel (0) target = $region25
    $region24: #{tpu_custom_call.1} parent=1 // pred_region
      _
    $region25: #{tpu_custom_call.1} parent=1 // pred_fallthru
      _
    // Predicated region
    $region26: #{tpu_custom_call.1} parent=1 // pred_check
      _
    $region27: #{tpu_custom_call.1} parent=1 // pred_check_branch
      %26 = sbr.rel (0) target = $region29
    $region28: #{tpu_custom_call.1} parent=1 // pred_region
      _
    $region29: #{tpu_custom_call.1} parent=1 // pred_fallthru
      _
    %p27 = scmp.eq.s32.totalorder 0, 0
    // Predicated region
    $region30: #{tpu_custom_call.1} parent=1 // pred_check
      %p28 = pneg %p27
    $region31: #{tpu_custom_call.1} parent=1 // pred_check_branch
      %30 = sbr.rel (%p28) target = $region33
    $region32: #{tpu_custom_call.1} parent=1 // pred_region
      %vm31 = vcmask 64512
      %32 = vst.msk [vmem:[#allocation2] sm:$0xff] %vm31, 0.0
      %33 = vst.msk [vmem:[#allocation2 + $0x8] sm:$0xff] %vm31, 0.0
    $region33: #{tpu_custom_call.1} parent=1 // pred_fallthru
      _
    %v34 = vld [vmem:[%s0] sm:$0xf]
    %v35 = vld [vmem:[%s0 + $0x4] sm:$0xf]
    %v36 = vunpack.c.l.bf16 %v34
    %v37 = vunpack.c.l.bf16 %v35
    %v38 = vld [vmem:[%s1] sm:$0xff]
    %v39 = vld [vmem:[%s1 + $0x8] sm:$0xff]
    %v40 = vld [vmem:[#allocation2] sm:$0xff]
    %v41 = vld [vmem:[#allocation2 + $0x8] sm:$0xff]
    %vm42 = vcmask 130048
    %v44 = vsel %vm42, %v36, 0
    %v47 = vsel %vm42, %v37, 0
    %49 = vmatprep.subr.mxu0 0.0
    %50 = vmatpush1.msra.mxu0 %v38
    %51 = vmatprep.subr.mxu0 0.0
    %52 = vmatpush1.msra.mxu0 %v39
    %53 = vmatprep.subr.mxu0 0.0
    %54 = vmatpush1.msra.mxu0 0.0
    %55 = vmatprep.subr.mxu0 0.0
    %56 = vmatpush1.msra.mxu0 0.0
    %57 = vmatprep.subr.mxu0 0.0
    %58 = vmatpush1.msra.mxu0 0.0
    %59 = vmatprep.subr.mxu0 0.0
    %60 = vmatpush1.msra.mxu0 0.0
    %61 = vmatprep.subr.mxu0 0.0
    %62 = vmatpush1.msra.mxu0 0.0
    %63 = vmatprep.subr.mxu0 0.0
    %64 = vmatpush1.msra.mxu0 0.0
    %65 = vmatprep.subr.mxu0 0.0
    %66 = vmatpush1.msra.mxu0 0.0
    %67 = vmatprep.subr.mxu0 0.0
    %68 = vmatpush1.msra.mxu0 0.0
    %69 = vmatprep.subr.mxu0 0.0
    %70 = vmatpush1.msra.mxu0 0.0
    %71 = vmatprep.subr.mxu0 0.0
    %72 = vmatpush1.msra.mxu0 0.0
    %73 = vmatprep.subr.mxu0 0.0
    %74 = vmatpush1.msra.mxu0 0.0
    %75 = vmatprep.subr.mxu0 0.0
    %76 = vmatpush1.msra.mxu0 0.0
    %77 = vmatprep.subr.mxu0 0.0
    %78 = vmatpush1.msra.mxu0 0.0
    %79 = vmatprep.subr.mxu0 0.0
    %80 = vmatpush1.msra.mxu0 0.0
    %81 = vmatprep.subr.mxu0 0.0
    %82 = vmatpush1.msra.mxu0 0.0
    %83 = vmatprep.subr.mxu0 0.0
    %84 = vmatpush1.msra.mxu0 0.0
    %85 = vmatprep.subr.mxu0 0.0
    %86 = vmatpush1.msra.mxu0 0.0
    %87 = vmatprep.subr.mxu0 0.0
    %88 = vmatpush1.msra.mxu0 0.0
    %89 = vmatprep.subr.mxu0 0.0
    %90 = vmatpush1.msra.mxu0 0.0
    %91 = vmatprep.subr.mxu0 0.0
    %92 = vmatpush1.msra.mxu0 0.0
    %93 = vmatprep.subr.mxu0 0.0
    %94 = vmatpush1.msra.mxu0 0.0
    %95 = vmatprep.subr.mxu0 0.0
    %96 = vmatpush1.msra.mxu0 0.0
    %97 = vmatprep.subr.mxu0 0.0
    %98 = vmatpush1.msra.mxu0 0.0
    %99 = vmatprep.subr.mxu0 0.0
    %100 = vmatpush1.msra.mxu0 0.0
    %101 = vmatprep.subr.mxu0 0.0
    %102 = vmatpush1.msra.mxu0 0.0
    %103 = vmatprep.subr.mxu0 0.0
    %104 = vmatpush1.msra.mxu0 0.0
    %105 = vmatprep.subr.mxu0 0.0
    %106 = vmatpush1.msra.mxu0 0.0
    %107 = vmatprep.subr.mxu0 0.0
    %108 = vmatpush1.msra.mxu0 0.0
    %109 = vmatprep.subr.mxu0 0.0
    %110 = vmatpush1.msra.mxu0 0.0
    %111 = vmatprep.subr.mxu0 0.0
    %112 = vmatpush1.msra.mxu0 0.0
    %113 = vmatprep.mubr.f32.mxu0 0.0
    %114 = vmatmul.mubr.f32.gmra.mrb[0].mxu0 %v44
    %v115 = vpop.f32.mrb[0].mxu0
    %v116 = vadd.f32 0.0, %v115
    %v117 = vpop.f32.mrb[0].mxu0
    %118 = vmatprep.mubr.f32.mxu0 0.0
    %119 = vmatmul.mubr.f32.gmra.mrb[0].mxu0 %v47
    %v120 = vpop.f32.mrb[0].mxu0
    %v121 = vadd.f32 0.0, %v120
    %v122 = vpop.f32.mrb[0].mxu0
    %123 = vdwg.mxu0
    %v124 = vadd.f32 %v40, %v116
    %v125 = vadd.f32 %v41, %v121
    %vm126 = vcmask 64512
    %127 = vst.msk [vmem:[#allocation2] sm:$0xff] %vm126, %v124
    %128 = vst.msk [vmem:[#allocation2 + $0x8] sm:$0xff] %vm126, %v125
    // Predicated region
    $region34: #{tpu_custom_call.1} parent=1 // pred_check
      %p129 = pneg %p27
    $region35: #{tpu_custom_call.1} parent=1 // pred_check_branch
      %131 = sbr.rel (%p129) target = $region37
    $region36: #{tpu_custom_call.1} parent=1 // pred_region
      %v132 = vld [vmem:[%s2] sm:$0xff]
      %v133 = vld [vmem:[%s2 + $0x8] sm:$0xff]
      %v134 = vld [vmem:[#allocation2] sm:$0xff]
      %v135 = vld [vmem:[#allocation2 + $0x8] sm:$0xff]
      %v136 = vld [vmem:[%s4] sm:$0xff]
      %v137 = vld [vmem:[%s3] sm:$0xff]
      %v139 = vsel %vm126, %v134, 0
      %v142 = vsel %vm126, %v135, 0
      %144 = vmatprep.subr.mxu0 0.0
      %145 = vmatpush1.msra.mxu0 %v137
      %146 = vmatprep.subr.mxu0 0.0
      %147 = vmatpush1.msra.mxu0 0.0
      %148 = vmatprep.subr.mxu0 0.0
      %149 = vmatpush1.msra.mxu0 0.0
      %150 = vmatprep.subr.mxu0 0.0
      %151 = vmatpush1.msra.mxu0 0.0
      %152 = vmatprep.subr.mxu0 0.0
      %153 = vmatpush1.msra.mxu0 0.0
      %154 = vmatprep.subr.mxu0 0.0
      %155 = vmatpush1.msra.mxu0 0.0
      %156 = vmatprep.subr.mxu0 0.0
      %157 = vmatpush1.msra.mxu0 0.0
      %158 = vmatprep.subr.mxu0 0.0
      %159 = vmatpush1.msra.mxu0 0.0
      %160 = vmatprep.subr.mxu0 0.0
      %161 = vmatpush1.msra.mxu0 0.0
      %162 = vmatprep.subr.mxu0 0.0
      %163 = vmatpush1.msra.mxu0 0.0
      %164 = vmatprep.subr.mxu0 0.0
      %165 = vmatpush1.msra.mxu0 0.0
      %166 = vmatprep.subr.mxu0 0.0
      %167 = vmatpush1.msra.mxu0 0.0
      %168 = vmatprep.subr.mxu0 0.0
      %169 = vmatpush1.msra.mxu0 0.0
      %170 = vmatprep.subr.mxu0 0.0
      %171 = vmatpush1.msra.mxu0 0.0
      %172 = vmatprep.subr.mxu0 0.0
      %173 = vmatpush1.msra.mxu0 0.0
      %174 = vmatprep.subr.mxu0 0.0
      %175 = vmatpush1.msra.mxu0 0.0
      %176 = vmatprep.subr.mxu0 0.0
      %177 = vmatpush1.msra.mxu0 0.0
      %178 = vmatprep.subr.mxu0 0.0
      %179 = vmatpush1.msra.mxu0 0.0
      %180 = vmatprep.subr.mxu0 0.0
      %181 = vmatpush1.msra.mxu0 0.0
      %182 = vmatprep.subr.mxu0 0.0
      %183 = vmatpush1.msra.mxu0 0.0
      %184 = vmatprep.subr.mxu0 0.0
      %185 = vmatpush1.msra.mxu0 0.0
      %186 = vmatprep.subr.mxu0 0.0
      %187 = vmatpush1.msra.mxu0 0.0
      %188 = vmatprep.subr.mxu0 0.0
      %189 = vmatpush1.msra.mxu0 0.0
      %190 = vmatprep.subr.mxu0 0.0
      %191 = vmatpush1.msra.mxu0 0.0
      %192 = vmatprep.subr.mxu0 0.0
      %193 = vmatpush1.msra.mxu0 0.0
      %194 = vmatprep.subr.mxu0 0.0
      %195 = vmatpush1.msra.mxu0 0.0
      %196 = vmatprep.subr.mxu0 0.0
      %197 = vmatpush1.msra.mxu0 0.0
      %198 = vmatprep.subr.mxu0 0.0
      %199 = vmatpush1.msra.mxu0 0.0
      %200 = vmatprep.subr.mxu0 0.0
      %201 = vmatpush1.msra.mxu0 0.0
      %202 = vmatprep.subr.mxu0 0.0
      %203 = vmatpush1.msra.mxu0 0.0
      %204 = vmatprep.subr.mxu0 0.0
      %205 = vmatpush1.msra.mxu0 0.0
      %206 = vmatprep.subr.mxu0 0.0
      %207 = vmatpush1.msra.mxu0 0.0
      %208 = vmatprep.mubr.f32.mxu0 0.0
      %209 = vmatmul.mubr.f32.gmra.mrb[0].mxu0 %v139
      %v210 = vpop.f32.mrb[0].mxu0
      %v211 = vadd.f32 0.0, %v210
      %v212 = vpop.f32.mrb[0].mxu0
      %213 = vmatprep.mubr.f32.mxu0 0.0
      %214 = vmatmul.mubr.f32.gmra.mrb[0].mxu0 %v142
      %v215 = vpop.f32.mrb[0].mxu0
      %v216 = vadd.f32 0.0, %v215
      %v217 = vpop.f32.mrb[0].mxu0
      %218 = vdwg.mxu0
      %v220 = vsel %vm126, %v132, 0
      %v223 = vsel %vm126, %v133, 0
      %225 = vmatprep.subr.mxu0 0.0
      %226 = vmatpush1.msra.mxu0 %v136
      %227 = vmatprep.subr.mxu0 0.0
      %228 = vmatpush1.msra.mxu0 0.0
      %229 = vmatprep.subr.mxu0 0.0
      %230 = vmatpush1.msra.mxu0 0.0
      %231 = vmatprep.subr.mxu0 0.0
      %232 = vmatpush1.msra.mxu0 0.0
      %233 = vmatprep.subr.mxu0 0.0
      %234 = vmatpush1.msra.mxu0 0.0
      %235 = vmatprep.subr.mxu0 0.0
      %236 = vmatpush1.msra.mxu0 0.0
      %237 = vmatprep.subr.mxu0 0.0
      %238 = vmatpush1.msra.mxu0 0.0
      %239 = vmatprep.subr.mxu0 0.0
      %240 = vmatpush1.msra.mxu0 0.0
      %241 = vmatprep.subr.mxu0 0.0
      %242 = vmatpush1.msra.mxu0 0.0
      %243 = vmatprep.subr.mxu0 0.0
      %244 = vmatpush1.msra.mxu0 0.0
      %245 = vmatprep.subr.mxu0 0.0
      %246 = vmatpush1.msra.mxu0 0.0
      %247 = vmatprep.subr.mxu0 0.0
      %248 = vmatpush1.msra.mxu0 0.0
      %249 = vmatprep.subr.mxu0 0.0
      %250 = vmatpush1.msra.mxu0 0.0
      %251 = vmatprep.subr.mxu0 0.0
      %252 = vmatpush1.msra.mxu0 0.0
      %253 = vmatprep.subr.mxu0 0.0
      %254 = vmatpush1.msra.mxu0 0.0
      %255 = vmatprep.subr.mxu0 0.0
      %256 = vmatpush1.msra.mxu0 0.0
      %257 = vmatprep.subr.mxu0 0.0
      %258 = vmatpush1.msra.mxu0 0.0
      %259 = vmatprep.subr.mxu0 0.0
      %260 = vmatpush1.msra.mxu0 0.0
      %261 = vmatprep.subr.mxu0 0.0
      %262 = vmatpush1.msra.mxu0 0.0
      %263 = vmatprep.subr.mxu0 0.0
      %264 = vmatpush1.msra.mxu0 0.0
      %265 = vmatprep.subr.mxu0 0.0
      %266 = vmatpush1.msra.mxu0 0.0
      %267 = vmatprep.subr.mxu0 0.0
      %268 = vmatpush1.msra.mxu0 0.0
      %269 = vmatprep.subr.mxu0 0.0
      %270 = vmatpush1.msra.mxu0 0.0
      %271 = vmatprep.subr.mxu0 0.0
      %272 = vmatpush1.msra.mxu0 0.0
      %273 = vmatprep.subr.mxu0 0.0
      %274 = vmatpush1.msra.mxu0 0.0
      %275 = vmatprep.subr.mxu0 0.0
      %276 = vmatpush1.msra.mxu0 0.0
      %277 = vmatprep.subr.mxu0 0.0
      %278 = vmatpush1.msra.mxu0 0.0
      %279 = vmatprep.subr.mxu0 0.0
      %280 = vmatpush1.msra.mxu0 0.0
      %281 = vmatprep.subr.mxu0 0.0
      %282 = vmatpush1.msra.mxu0 0.0
      %283 = vmatprep.subr.mxu0 0.0
      %284 = vmatpush1.msra.mxu0 0.0
      %285 = vmatprep.subr.mxu0 0.0
      %286 = vmatpush1.msra.mxu0 0.0
      %287 = vmatprep.subr.mxu0 0.0
      %288 = vmatpush1.msra.mxu0 0.0
      %289 = vmatprep.mubr.f32.mxu0 0.0
      %290 = vmatmul.mubr.f32.gmra.mrb[0].mxu0 %v220
      %v291 = vpop.f32.mrb[0].mxu0
      %v292 = vadd.f32 %v211, %v291
      %v293 = vpop.f32.mrb[0].mxu0
      %294 = vmatprep.mubr.f32.mxu0 0.0
      %295 = vmatmul.mubr.f32.gmra.mrb[0].mxu0 %v223
      %v296 = vpop.f32.mrb[0].mxu0
      %v297 = vadd.f32 %v216, %v296
      %v298 = vpop.f32.mrb[0].mxu0
      %299 = vdwg.mxu0
      %v300 = vld [vmem:[%s5] sm:$0x1]
      %v301 = vld [vmem:[%s6] sm:$0x1]
      %v302 = vadd.f32 %v300, %v301
      %v304 = vlaneseq
      %v305 = vshrl.u32 %v304, 7
      %v306 = vsub.s32 0, %v305
      %v307 = vrot.slane %v302, %v306
      %v309 = vadd.f32 %v292, %v307
      %v310 = vadd.f32 %v297, %v307
      %vm311 = vcmask 261120
      %312 = vst.msk [vmem:[#allocation4] sm:$0xff] %vm311, %v309
      %313 = vst.msk [vmem:[#allocation4 + $0x8] sm:$0xff] %vm311, %v310
    $region37: #{tpu_custom_call.1} parent=1 // pred_fallthru
      _
    // Predicated region
    $region38: #{tpu_custom_call.1} parent=1 // pred_check
      _
    $region39: #{tpu_custom_call.1} parent=1 // pred_check_branch
      %315 = sbr.rel (0) target = $region41
    $region40: #{tpu_custom_call.1} parent=1 // pred_region
      %s317 = ssub.s32 256, 256
      %318 = vsyncadd [#allocation5], %s317
      %s319 = sshll.u32 [#allocation4], 4
      %s320 = int_to_ptr.vmem [resolvable:$true] %s319
      %325 = dma.vmem_to_hbm [thread:$0]  %s320, 256, %s7, [#allocation5], 128, 128, 8
    $region41: #{tpu_custom_call.1} parent=1 // pred_fallthru
      _
    // Predicated region
    $region42: #{tpu_custom_call.1} parent=1 // pred_check
      _
    $region43: #{tpu_custom_call.1} parent=1 // pred_check_branch
      %327 = sbr.rel (0) target = $region45
    $region44: #{tpu_custom_call.1} parent=1 // pred_region
      %328 = dma.done [#allocation5], 256
    $region45: #{tpu_custom_call.1} parent=1 // pred_fallthru
      _
    %329 = vsyncpa [#allocation5], 1

</llo_original>
